<compile_context>
chip_gen: v5e
topology: v5e:2x2
jax: 0.10.0
libtpu: 0.0.40
codegen_flags: <defaults>
</compile_context>

<pallas_src>
import jax
import jax.numpy as jnp
from jax.experimental import pallas as pl
from jax.experimental.pallas import tpu as pltpu


def _identity_kernel(x_ref, o_ref):
    # Pure pass-through on the current VMEM tile.
    o_ref[...] = x_ref[...]


def _vmem_capacity_bytes():
    """Physical VMEM of the local TPU generation; conservative default on failure."""
    try:
        return int(pltpu.get_tpu_info().vmem_capacity_bytes)
    except Exception:
        return 64 * 1024 * 1024  # v7x per-TensorCore VMEM (smallest current gen)


def _tile_budget():
    """(target_tile_bytes, vmem_limit_bytes) chosen per TPU generation."""
    cap = _vmem_capacity_bytes()
    if cap >= 100 * 1024 * 1024:
        # v5e / v6e: 128 MiB physical VMEM -> big tiles, generous scoped limit.
        return 12 * 1024 * 1024, 64 * 1024 * 1024
    # v7x: 64 MiB per TensorCore -> keep 2 in + 2 out buffers (~32 MiB) well under cap.
    return 8 * 1024 * 1024, 48 * 1024 * 1024


def _choose_lane_width(total):
    """Largest multiple of 128 (<=1024) dividing `total`, else None."""
    for cand in (1024, 512, 256, 128):
        if total % cand == 0:
            return cand
    return None


def _copy_call(x_view, block_shape, grid, index_map, vmem_limit, total_bytes):
    return pl.pallas_call(
        _identity_kernel,
        out_shape=jax.ShapeDtypeStruct(x_view.shape, x_view.dtype),
        grid_spec=pltpu.PrefetchScalarGridSpec(
            num_scalar_prefetch=0,
            grid=grid,
            in_specs=[pl.BlockSpec(block_shape, index_map)],
            out_specs=pl.BlockSpec(block_shape, index_map),
        ),
        compiler_params=pltpu.CompilerParams(
            dimension_semantics=("parallel",),   # megacore-shardable copy (v7x)
            vmem_limit_bytes=vmem_limit,
        ),
        cost_estimate=pl.CostEstimate(
            flops=0, transcendentals=0, bytes_accessed=2 * total_bytes
        ),
    )(x_view)


def network_forward(x):
    """Identity forward pass (equivalent to Network().forward(x))."""
    orig_shape = x.shape
    dtype = x.dtype
    total = int(x.size)
    if total == 0:
        return x

    itemsize = jnp.dtype(dtype).itemsize
    # Sublane packing: 8 rows for 32-bit, 16 for 16-bit, 32 for 8-bit dtypes.
    sub_pack = {4: 8, 2: 16, 1: 32}.get(itemsize, 8)
    target_tile_bytes, vmem_limit = _tile_budget()
    total_bytes = total * itemsize

    lanes = _choose_lane_width(total)
    if lanes is not None:
        # Lane-dense 2-D streaming copy: every store is a full-lane `vst`.
        rows = total // lanes
        x2 = x.reshape(rows, lanes)

        tile_rows = (target_tile_bytes // (lanes * itemsize)) // sub_pack * sub_pack
        tile_rows = max(sub_pack, tile_rows)
        if tile_rows >= rows:
            tile_rows = rows  # full second-to-last dim is always a legal block shape

        grid = (pl.cdiv(rows, tile_rows),)
        out2 = _copy_call(x2, (tile_rows, lanes), grid, lambda i: (i, 0),
                          vmem_limit, total_bytes)
        return out2.reshape(orig_shape)

    # Ragged fallback (element count not a multiple of 128): flat 1-D view with
    # lane-aligned chunks so only the final block needs masked stores.
    x1 = x.reshape(total)
    align = 128 * sub_pack
    chunk = max(align, (target_tile_bytes // itemsize) // align * align)
    if chunk >= total:
        chunk = total  # single full-array block is always legal
    grid = (pl.cdiv(total, chunk),)
    out1 = _copy_call(x1, (chunk,), grid, lambda i: (i,), vmem_limit, total_bytes)
    return out1.reshape(orig_shape)


if __name__ == "__main__":
    key = jax.random.PRNGKey(0)
    # Small NCHW input consistent with a conv-style module interface.
    x = jax.random.normal(key, (2, 4, 16, 16), dtype=jnp.float32)

    y = network_forward(x)
    jax.block_until_ready(y)

    # Verify identity semantics.
    assert y.shape == x.shape and y.dtype == x.dtype
    assert bool(jnp.all(y == x))

    # TODO(synk): Network.save/load and init_weights are host-side checkpoint /
    # init utilities with no role in the forward pass; not kernel work.
    print("KERNEL_OK")
</pallas_src>

<mosaic_0001>
module attributes {stable_mosaic.version = 11 : i64} {
  func.func @_identity_kernel(%arg0: i32, %arg1: memref<2x1024xf32, #tpu.memory_space<vmem>>, %arg2: memref<2x1024xf32, #tpu.memory_space<vmem>>) attributes {dimension_semantics = [#tpu.dimension_semantics<parallel>], iteration_bounds = array<i64: 1>, scalar_prefetch = 0 : i64, scratch_operands = 0 : i64, tpu.core_type = #tpu.core_type<tc>, window_params = [{transform_indices = @transform_0, window_bounds = array<i64: 2, 1024>}, {transform_indices = @transform_1, window_bounds = array<i64: 2, 1024>}]} {
    %c0 = arith.constant 0 : index
    %c0_0 = arith.constant 0 : index
    %0 = vector.load %arg1[%c0, %c0_0] : memref<2x1024xf32, #tpu.memory_space<vmem>>, vector<2x1024xf32>
    %c0_1 = arith.constant 0 : index
    %c0_2 = arith.constant 0 : index
    %1 = vector.load %arg2[%c0_1, %c0_2] : memref<2x1024xf32, #tpu.memory_space<vmem>>, vector<2x1024xf32>
    tpu.vector_store %arg2[%c0_1, %c0_2], %0 {strides = array<i32>} : memref<2x1024xf32, #tpu.memory_space<vmem>>, vector<2x1024xf32>,
    return
  }
  func.func @transform_0(%arg0: i32) -> (i32, i32) {
    %c0_i32 = arith.constant 0 : i32
    %c0_i32_0 = arith.constant 0 : i32
    return %arg0, %c0_i32 : i32, i32
  }
  func.func @transform_1(%arg0: i32) -> (i32, i32) {
    %c0_i32 = arith.constant 0 : i32
    %c0_i32_0 = arith.constant 0 : i32
    return %arg0, %c0_i32 : i32, i32
  }
}

</mosaic_0001>

<llo_original>
// kernel: tpu_custom_call.1
$region0: #{tpu_custom_call.1}
  #allocation0 [shape = 'u32[]', space=smem, size = 0x4, offset = 0x4, fixed_abs, tag = 'smem constant byte address 0x4 - core index']
  #allocation1 [shape = 'u32[72,128]{1,0:T(1,128)}', space=vmem, size = 0x9000, scoped, tag = 'internal scratch']
  %s0 = inlined_call_operand.hbm [shape: f32[2,1024], index: 0, kind: input, shape index: {}]
  %s1 = inlined_call_operand.hbm [shape: f32[2,1024], index: 1, kind: output, shape index: {}]
  %s2 = sld [smem:[#allocation0]]
  $region18: #{tpu_custom_call.1} parent=0
    _
  %s4 = ssub.s32 1, %s2
  %s5 = scalar_select 0, %s4, %s2
  $region1: #{tpu_custom_call.1} parent=0
    #allocation2 [shape = 'u8[8192]{0}', space=vmem, size = 0x2000, scoped, tag = 'input window, operand 0, single buffered']
    #allocation3 [shape = 's32[1]{0}', space=sflag, size = 0x4, scoped, tag = 'scoped memory for tpu_custom_call.1']
    #allocation4 [shape = 's32[1]{0}', space=sflag, size = 0x4, scoped, tag = 'scoped memory for tpu_custom_call.1']
    #allocation5 [shape = 'u8[8192]{0}', space=vmem, size = 0x2000, scoped, tag = 'output window, operand 0, single buffered']
    %6 = vsyncpa [#allocation3], 0
    %7 = vsyncpa [#allocation4], 0
    // Predicated region
    $region2: #{tpu_custom_call.1} parent=1 // pred_check
      _
    $region3: #{tpu_custom_call.1} parent=1 // pred_check_branch
      %9 = sbr.rel (0) target = $region5
    $region4: #{tpu_custom_call.1} parent=1 // pred_region
      %11 = vsyncadd [#allocation3], 0
      %s13 = sshll.u32 %s0, 4
      %s14 = int_to_ptr.hbm [resolvable:$true] %s13
      %s15 = sshll.u32 [#allocation2], 4
      %s16 = int_to_ptr.vmem [resolvable:$true] %s15
      %18 = dma.hbm_to_vmem [thread:$0]  %s14, 256, %s16, [#allocation3]
    $region5: #{tpu_custom_call.1} parent=1 // pred_fallthru
      _
    // Predicated region
    $region6: #{tpu_custom_call.1} parent=1 // pred_check
      _
    $region7: #{tpu_custom_call.1} parent=1 // pred_check_branch
      %20 = sbr.rel (0) target = $region9
    $region8: #{tpu_custom_call.1} parent=1 // pred_region
      %22 = dma.done [#allocation3], 256
    $region9: #{tpu_custom_call.1} parent=1 // pred_fallthru
      _
    %v23 = vld [vmem:[#allocation2] sm:$0xff]
    %v24 = vld [vmem:[#allocation2 + $0x8] sm:$0xff]
    %25 = vst [vmem:[#allocation5] sm:$0xff] %v23
    %26 = vst [vmem:[#allocation5 + $0x8] sm:$0xff] %v24
    // Predicated region
    $region10: #{tpu_custom_call.1} parent=1 // pred_check
      _
    $region11: #{tpu_custom_call.1} parent=1 // pred_check_branch
      %28 = sbr.rel (0) target = $region13
    $region12: #{tpu_custom_call.1} parent=1 // pred_region
      %30 = vsyncadd [#allocation4], 0
      %s32 = sshll.u32 [#allocation5], 4
      %s33 = int_to_ptr.vmem [resolvable:$true] %s32
      %s34 = sshll.u32 %s1, 4
      %s35 = int_to_ptr.hbm [resolvable:$true] %s34
      %37 = dma.vmem_to_hbm [thread:$0]  %s33, 256, %s35, [#allocation4]
    $region13: #{tpu_custom_call.1} parent=1 // pred_fallthru
      _
    // Predicated region
    $region14: #{tpu_custom_call.1} parent=1 // pred_check
      _
    $region15: #{tpu_custom_call.1} parent=1 // pred_check_branch
      %39 = sbr.rel (0) target = $region17
    $region16: #{tpu_custom_call.1} parent=1 // pred_region
      %41 = dma.done [#allocation4], 256
    $region17: #{tpu_custom_call.1} parent=1 // pred_fallthru
      _
    %42 = vsyncpa [#allocation3], 1
    %43 = vsyncpa [#allocation4], 1

</llo_original>
